<compile_context>
chip_gen: v6e
topology: v6e:2x2x1
jax: 0.10.0
libtpu: 0.0.40
codegen_flags: <defaults>
</compile_context>

<pallas_src>
import jax
import jax.numpy as jnp
from jax import lax
from jax.experimental import pallas as pl
from jax.experimental.pallas import tpu as pltpu

LANE = 128  # TPU lane width; each of Q/K/V is padded to one full lane tile.


def make_attention_kernel(B, S, d_pad):
    def kernel(seqlen_ref,   # scalar-prefetch (SMEM): (B,) int32
               x_ref,        # (B*S, Din)      f32
               wqkv_ref,     # (Din, 3*d_pad)  f32  (wq*scale | wk | wv), zero-padded lanes
               bqkv_ref,     # (1,   3*d_pad)  f32  (bq*scale | bk | bv), zero-padded lanes
               o_ref):       # (B*S, d_pad)    f32  (cols >= Dout are exactly 0)
        # One fused projection for all batches and all of Q/K/V (single MXU pass).
        x = x_ref[...]
        qkv = jnp.dot(x, wqkv_ref[...],
                      preferred_element_type=jnp.float32) + bqkv_ref[...]

        # Hoisted out of the unrolled batch loop (JAX does not CSE iota).
        key_ids = lax.broadcasted_iota(jnp.int32, (S, S), 1)

        for b in range(B):   # B is tiny -> static unroll, no grid steps
            r0 = b * S
            # 128-aligned column slices of the fused projection -> free views.
            q = qkv[r0:r0 + S, 0:d_pad]
            k = qkv[r0:r0 + S, d_pad:2 * d_pad]
            v = qkv[r0:r0 + S, 2 * d_pad:3 * d_pad]

            # scores[q_pos, k_pos]; the 1/sqrt(Dout) scale is already folded
            # into the Q columns, and zero-padded feature lanes contribute 0.
            scores = lax.dot_general(q, k, (((1,), (1,)), ((), ())),
                                     preferred_element_type=jnp.float32)

            # Mask key positions >= seqlengths[b] (finite -> no NaN even for a
            # zero-length row; identical to -inf masking for seqlen >= 1).
            scores = jnp.where(key_ids < seqlen_ref[b], scores, -1e30)

            # Softmax over keys in f32 (matches F.softmax(scores.float(), -1)).
            m = jnp.max(scores, axis=-1, keepdims=True)
            e = jnp.exp(scores - m)
            atten = e * pl.reciprocal(jnp.sum(e, axis=-1, keepdims=True),
                                      approx=False)

            # output = atten @ V + V, stored straight into the output ref at a
            # sublane-aligned row offset (S % 8 == 0), unmasked 128-lane stores.
            o_ref[r0:r0 + S, :] = (jnp.dot(atten, v,
                                           preferred_element_type=jnp.float32)
                                   + v).astype(o_ref.dtype)

    return kernel


def prepare_qkv_params(wq, bq, wk, bk, wv, bv, d_pad=LANE):
    """Fuse + lane-pad + pre-scale the Q/K/V projection parameters.

    Call ONCE at init time (not per forward).  Weights are (Din, Dout),
    already transposed relative to PyTorch nn.Linear.  The 1/sqrt(Dout)
    softmax scale is folded into the Q columns; padding lanes are exactly 0
    so they contribute nothing to QK^T, atten@V, or the +V residual.
    """
    Din, Dout = wq.shape
    assert Dout <= d_pad
    scale = 1.0 / (float(Dout) ** 0.5)

    def pad_w(w, s):
        return jnp.zeros((Din, d_pad), w.dtype).at[:, :Dout].set(w * s)

    def pad_b(b_, s):
        return jnp.zeros((d_pad,), b_.dtype).at[:Dout].set(b_ * s)

    wqkv = jnp.concatenate([pad_w(wq, scale), pad_w(wk, 1.0), pad_w(wv, 1.0)],
                           axis=1)                                # (Din, 3*d_pad)
    bqkv = jnp.concatenate([pad_b(bq, scale), pad_b(bk, 1.0),
                            pad_b(bv, 1.0)]).reshape(1, 3 * d_pad)
    return wqkv, bqkv


def attention_model(plms1, seqlengths, wqkv, bqkv, d_out):
    B, S, Din = plms1.shape
    d_pad = wqkv.shape[1] // 3

    # Fold batch into the matmul M dimension (free row-major reshape in XLA).
    x2 = plms1.reshape(B * S, Din)

    grid_spec = pltpu.PrefetchScalarGridSpec(
        num_scalar_prefetch=1,            # seqlengths -> SMEM
        grid=(1,),                        # collapsed grid: one step does everything
        in_specs=[
            pl.BlockSpec((B * S, Din), lambda i, sl: (0, 0)),       # x
            pl.BlockSpec((Din, 3 * d_pad), lambda i, sl: (0, 0)),   # fused+padded W
            pl.BlockSpec((1, 3 * d_pad), lambda i, sl: (0, 0)),     # fused+padded b
        ],
        out_specs=pl.BlockSpec((B * S, d_pad), lambda i, sl: (0, 0)),
    )

    out = pl.pallas_call(
        make_attention_kernel(B, S, d_pad),
        out_shape=jax.ShapeDtypeStruct((B * S, d_pad), jnp.float32),
        grid_spec=grid_spec,
        compiler_params=pltpu.CompilerParams(
            dimension_semantics=("arbitrary",)),
    )(seqlengths.astype(jnp.int32), x2, wqkv, bqkv)

    # Drop the zero padding lanes and restore (B, S, Dout) -- cheap wrapper slice.
    return out[:, :d_out].reshape(B, S, d_out)


def reference(plms1, seqlengths, wq, bq, wk, bk, wv, bv):
    # Pure-JAX mirror of the PyTorch forward (for verification).
    Q = plms1 @ wq + bq
    K = plms1 @ wk + bk
    V = plms1 @ wv + bv
    d_out = Q.shape[-1]
    scores = jnp.einsum('bqd,bkd->bqk', Q, K) / jnp.sqrt(jnp.float32(d_out))
    S = scores.shape[-1]
    key_ids = jnp.arange(S)[None, None, :]
    mask = key_ids < seqlengths[:, None, None]
    scores = jnp.where(mask, scores, -jnp.inf)
    atten = jax.nn.softmax(scores.astype(jnp.float32), axis=-1)
    return atten @ V + V


if __name__ == "__main__":
    B, S, D_IN, D_OUT = 2, 16, 32, 32

    key = jax.random.PRNGKey(0)
    k1, k2, k3, k4, k5, k6, k7 = jax.random.split(key, 7)

    plms1 = jax.random.normal(k1, (B, S, D_IN), dtype=jnp.float32)
    # torch broadcasting in masked_softmax requires max(seqlengths) == S
    seqlengths = jnp.array([S, 10], dtype=jnp.int32)

    # PyTorch Linear weight is (out, in); stored transposed to (in, out).
    scale = 1.0 / jnp.sqrt(jnp.float32(D_IN))
    wq = jax.random.uniform(k2, (D_IN, D_OUT), jnp.float32, -scale, scale)
    wk = jax.random.uniform(k3, (D_IN, D_OUT), jnp.float32, -scale, scale)
    wv = jax.random.uniform(k4, (D_IN, D_OUT), jnp.float32, -scale, scale)
    bq = jax.random.uniform(k5, (D_OUT,), jnp.float32, -scale, scale)
    bk = jax.random.uniform(k6, (D_OUT,), jnp.float32, -scale, scale)
    bv = jax.random.uniform(k7, (D_OUT,), jnp.float32, -scale, scale)

    # Fuse / pad / pre-scale the projection params ONCE (init time, not per call).
    wqkv, bqkv = prepare_qkv_params(wq, bq, wk, bk, wv, bv)

    out = attention_model(plms1, seqlengths, wqkv, bqkv, D_OUT)
    out = jax.block_until_ready(out)

    ref = reference(plms1, seqlengths, wq, bq, wk, bk, wv, bv)
    assert out.shape == (B, S, D_OUT)
    assert jnp.allclose(out, ref, atol=1e-4, rtol=1e-4), "mismatch vs reference"

    print("KERNEL_OK")
</pallas_src>

<mosaic_0001>
module attributes {stable_mosaic.version = 11 : i64} {
  func.func @kernel(%arg0: i32, %arg1: memref<2xi32, #tpu.memory_space<smem>>, %arg2: memref<32x32xf32, #tpu.memory_space<vmem>>, %arg3: memref<32x384xf32, #tpu.memory_space<vmem>>, %arg4: memref<1x384xf32, #tpu.memory_space<vmem>>, %arg5: memref<32x128xf32, #tpu.memory_space<vmem>>) attributes {dimension_semantics = [#tpu.dimension_semantics<arbitrary>], iteration_bounds = array<i64: 1>, scalar_prefetch = 1 : i64, scratch_operands = 0 : i64, tpu.core_type = #tpu.core_type<tc>, window_params = [{pipeline_mode = #tpu.pipeline_mode<synchronous>, transform_indices = @transform_0, window_bounds = array<i64: 32, 32>}, {pipeline_mode = #tpu.pipeline_mode<synchronous>, transform_indices = @transform_1, window_bounds = array<i64: 32, 384>}, {pipeline_mode = #tpu.pipeline_mode<synchronous>, transform_indices = @transform_2, window_bounds = array<i64: 1, 384>}, {pipeline_mode = #tpu.pipeline_mode<synchronous>, transform_indices = @transform_3, window_bounds = array<i64: 32, 128>}]} {
    %c0 = arith.constant 0 : index
    %c0_0 = arith.constant 0 : index
    %0 = vector.load %arg2[%c0, %c0_0] : memref<32x32xf32, #tpu.memory_space<vmem>>, vector<32x32xf32>
    %c0_1 = arith.constant 0 : index
    %c0_2 = arith.constant 0 : index
    %1 = vector.load %arg3[%c0_1, %c0_2] : memref<32x384xf32, #tpu.memory_space<vmem>>, vector<32x384xf32>
    %cst = arith.constant dense<0.000000e+00> : vector<32x384xf32>
    %2 = tpu.matmul %0, %1, %cst {dimension_numbers = #tpu.dot_dimension_numbers<[1], [0], [0], [1], [0, 0, 1, 1], [], []>} : vector<32x32xf32>, vector<32x384xf32>, vector<32x384xf32> -> vector<32x384xf32>
    %c0_3 = arith.constant 0 : index
    %c0_4 = arith.constant 0 : index
    %3 = vector.load %arg4[%c0_3, %c0_4] : memref<1x384xf32, #tpu.memory_space<vmem>>, vector<1x384xf32>
    %4 = vector.broadcast %3 : vector<1x384xf32> to vector<32x384xf32>
    %5 = arith.addf %2, %4 : vector<32x384xf32>
    %6 = tpu.iota {dimensions = array<i32: 1>} : vector<16x16xi32>
    %7 = vector.extract_strided_slice %5 {offsets = [0, 0], sizes = [16, 128], strides = [1, 1]} : vector<32x384xf32> to vector<16x128xf32>
    %8 = vector.extract_strided_slice %5 {offsets = [0, 128], sizes = [16, 128], strides = [1, 1]} : vector<32x384xf32> to vector<16x128xf32>
    %9 = vector.extract_strided_slice %5 {offsets = [0, 256], sizes = [16, 128], strides = [1, 1]} : vector<32x384xf32> to vector<16x128xf32>
    %cst_5 = arith.constant dense<0.000000e+00> : vector<16x16xf32>
    %10 = tpu.matmul %7, %8, %cst_5 {dimension_numbers = #tpu.dot_dimension_numbers<[1], [1], [0], [0], [0, 0, 1, 0], [], []>} : vector<16x128xf32>, vector<16x128xf32>, vector<16x16xf32> -> vector<16x16xf32>
    %c0_6 = arith.constant 0 : index
    %11 = memref.load %arg1[%c0_6] : memref<2xi32, #tpu.memory_space<smem>>
    %12 = vector.broadcast %11 : i32 to vector<16x16xi32>
    %13 = arith.cmpi slt, %6, %12 : vector<16x16xi32>
    %cst_7 = arith.constant -1.000000e+30 : f32
    %14 = vector.broadcast %cst_7 : f32 to vector<16x16xf32>
    %15 = arith.select %13, %10, %14 : vector<16x16xi1>, vector<16x16xf32>
    %cst_8 = arith.constant dense<0xFF800000> : vector<16xf32>
    %16 = vector.multi_reduction <maximumf>, %15, %cst_8 [1] : vector<16x16xf32> to vector<16xf32>
    %17 = vector.shape_cast %16 : vector<16xf32> to vector<16x1xf32>
    %18 = vector.broadcast %17 : vector<16x1xf32> to vector<16x16xf32>
    %19 = arith.subf %15, %18 : vector<16x16xf32>
    %20 = math.exp %19 : vector<16x16xf32>
    %cst_9 = arith.constant dense<0.000000e+00> : vector<16xf32>
    %21 = vector.multi_reduction <add>, %20, %cst_9 [1] : vector<16x16xf32> to vector<16xf32>
    %22 = vector.shape_cast %21 : vector<16xf32> to vector<16x1xf32>
    %23 = tpu.reciprocal %22 : vector<16x1xf32> -> vector<16x1xf32>
    %24 = vector.broadcast %23 : vector<16x1xf32> to vector<16x16xf32>
    %25 = arith.mulf %20, %24 : vector<16x16xf32>
    %cst_10 = arith.constant dense<0.000000e+00> : vector<16x128xf32>
    %26 = tpu.matmul %25, %9, %cst_10 {dimension_numbers = #tpu.dot_dimension_numbers<[1], [0], [0], [1], [0, 0, 1, 1], [], []>} : vector<16x16xf32>, vector<16x128xf32>, vector<16x128xf32> -> vector<16x128xf32>
    %27 = arith.addf %26, %9 : vector<16x128xf32>
    %c0_11 = arith.constant 0 : index
    %c0_12 = arith.constant 0 : index
    %28 = vector.load %arg5[%c0_11, %c0_12] : memref<32x128xf32, #tpu.memory_space<vmem>>, vector<16x128xf32>
    tpu.vector_store %arg5[%c0_11, %c0_12], %27 {strides = array<i32>} : memref<32x128xf32, #tpu.memory_space<vmem>>, vector<16x128xf32>,
    %29 = vector.extract_strided_slice %5 {offsets = [16, 0], sizes = [16, 128], strides = [1, 1]} : vector<32x384xf32> to vector<16x128xf32>
    %30 = vector.extract_strided_slice %5 {offsets = [16, 128], sizes = [16, 128], strides = [1, 1]} : vector<32x384xf32> to vector<16x128xf32>
    %31 = vector.extract_strided_slice %5 {offsets = [16, 256], sizes = [16, 128], strides = [1, 1]} : vector<32x384xf32> to vector<16x128xf32>
    %cst_13 = arith.constant dense<0.000000e+00> : vector<16x16xf32>
    %32 = tpu.matmul %29, %30, %cst_13 {dimension_numbers = #tpu.dot_dimension_numbers<[1], [1], [0], [0], [0, 0, 1, 0], [], []>} : vector<16x128xf32>, vector<16x128xf32>, vector<16x16xf32> -> vector<16x16xf32>
    %c1 = arith.constant 1 : index
    %33 = memref.load %arg1[%c1] : memref<2xi32, #tpu.memory_space<smem>>
    %34 = vector.broadcast %33 : i32 to vector<16x16xi32>
    %35 = arith.cmpi slt, %6, %34 : vector<16x16xi32>
    %cst_14 = arith.constant -1.000000e+30 : f32
    %36 = vector.broadcast %cst_14 : f32 to vector<16x16xf32>
    %37 = arith.select %35, %32, %36 : vector<16x16xi1>, vector<16x16xf32>
    %cst_15 = arith.constant dense<0xFF800000> : vector<16xf32>
    %38 = vector.multi_reduction <maximumf>, %37, %cst_15 [1] : vector<16x16xf32> to vector<16xf32>
    %39 = vector.shape_cast %38 : vector<16xf32> to vector<16x1xf32>
    %40 = vector.broadcast %39 : vector<16x1xf32> to vector<16x16xf32>
    %41 = arith.subf %37, %40 : vector<16x16xf32>
    %42 = math.exp %41 : vector<16x16xf32>
    %cst_16 = arith.constant dense<0.000000e+00> : vector<16xf32>
    %43 = vector.multi_reduction <add>, %42, %cst_16 [1] : vector<16x16xf32> to vector<16xf32>
    %44 = vector.shape_cast %43 : vector<16xf32> to vector<16x1xf32>
    %45 = tpu.reciprocal %44 : vector<16x1xf32> -> vector<16x1xf32>
    %46 = vector.broadcast %45 : vector<16x1xf32> to vector<16x16xf32>
    %47 = arith.mulf %42, %46 : vector<16x16xf32>
    %cst_17 = arith.constant dense<0.000000e+00> : vector<16x128xf32>
    %48 = tpu.matmul %47, %31, %cst_17 {dimension_numbers = #tpu.dot_dimension_numbers<[1], [0], [0], [1], [0, 0, 1, 1], [], []>} : vector<16x16xf32>, vector<16x128xf32>, vector<16x128xf32> -> vector<16x128xf32>
    %49 = arith.addf %48, %31 : vector<16x128xf32>
    %c16 = arith.constant 16 : index
    %c0_18 = arith.constant 0 : index
    %50 = vector.load %arg5[%c16, %c0_18] : memref<32x128xf32, #tpu.memory_space<vmem>>, vector<16x128xf32>
    tpu.vector_store %arg5[%c16, %c0_18], %49 {strides = array<i32>} : memref<32x128xf32, #tpu.memory_space<vmem>>, vector<16x128xf32>,
    return
  }
  func.func @transform_0(%arg0: i32, %arg1: memref<2xi32, #tpu.memory_space<smem>>) -> (i32, i32) {
    %c0_i32 = arith.constant 0 : i32
    %c0_i32_0 = arith.constant 0 : i32
    %c0_i32_1 = arith.constant 0 : i32
    return %c0_i32, %c0_i32_0 : i32, i32
  }
  func.func @transform_1(%arg0: i32, %arg1: memref<2xi32, #tpu.memory_space<smem>>) -> (i32, i32) {
    %c0_i32 = arith.constant 0 : i32
    %c0_i32_0 = arith.constant 0 : i32
    %c0_i32_1 = arith.constant 0 : i32
    return %c0_i32, %c0_i32_0 : i32, i32
  }
  func.func @transform_2(%arg0: i32, %arg1: memref<2xi32, #tpu.memory_space<smem>>) -> (i32, i32) {
    %c0_i32 = arith.constant 0 : i32
    %c0_i32_0 = arith.constant 0 : i32
    %c0_i32_1 = arith.constant 0 : i32
    return %c0_i32, %c0_i32_0 : i32, i32
  }
  func.func @transform_3(%arg0: i32, %arg1: memref<2xi32, #tpu.memory_space<smem>>) -> (i32, i32) {
    %c0_i32 = arith.constant 0 : i32
    %c0_i32_0 = arith.constant 0 : i32
    %c0_i32_1 = arith.constant 0 : i32
    return %c0_i32, %c0_i32_0 : i32, i32
  }
}

</mosaic_0001>

<llo_original>
// kernel: tpu_custom_call.1
$region0: #{tpu_custom_call.1}
  #allocation0 [shape = 'u32[]', space=smem, size = 0x4, offset = 0x4, fixed_abs, tag = 'smem constant byte address 0x4 - core index']
  #allocation1 [shape = 'u32[144,128]{1,0:T(1,128)}', space=vmem, size = 0x12000, scoped, tag = 'internal scratch']
  #allocation2 [shape = 's32[1]{0}', space=sflag, size = 0x4, scoped, tag = 'scoped memory for tpu_custom_call.1']
  #allocation3 [shape = 'u8[512]{0}', space=smem, size = 0x200, scoped, tag = 'prefetched SMEM operand 0']
  %s0 = inlined_call_operand.hbm [shape: s32[2], index: 0, kind: input, shape index: {}]
  %s1 = inlined_call_operand.hbm [shape: f32[32,32], index: 1, kind: input, shape index: {}]
  %s2 = inlined_call_operand.hbm [shape: f32[32,384], index: 2, kind: input, shape index: {}]
  %s3 = inlined_call_operand.vmem [shape: f32[1,384], index: 3, kind: input, shape index: {}]
  %s4 = inlined_call_operand.hbm [shape: f32[32,128], index: 4, kind: output, shape index: {}]
  %s5 = sld [smem:[#allocation0]]
  $region30: #{tpu_custom_call.1} parent=0
    _
  %s7 = ssub.s32 1, %s5
  %s8 = scalar_select 0, %s7, %s5
  %10 = dma.hbm_to_smem %s0, 16, [#allocation3], [#allocation2]
  %11 = dma.done [#allocation2], 16
  %12 = sfence
  $region1: #{tpu_custom_call.1} parent=0
    #allocation4 [shape = 'u8[16384]{0}', space=vmem, size = 0x4000, scoped, tag = 'input window, operand 1, single buffered']
    #allocation5 [shape = 's32[1]{0}', space=sflag, size = 0x4, scoped, tag = 'scoped memory for tpu_custom_call.1']
    #allocation6 [shape = 's32[1]{0}', space=sflag, size = 0x4, scoped, tag = 'scoped memory for tpu_custom_call.1']
    #allocation7 [shape = 'u8[49152]{0}', space=vmem, size = 0xc000, scoped, tag = 'input window, operand 2, single buffered']
    #allocation8 [shape = 's32[1]{0}', space=sflag, size = 0x4, scoped, tag = 'scoped memory for tpu_custom_call.1']
    #allocation9 [shape = 'u8[16384]{0}', space=vmem, size = 0x4000, scoped, tag = 'output window, operand 0, single buffered']
    %13 = vsyncpa [#allocation5], 0
    %14 = vsyncpa [#allocation8], 0
    %15 = vsyncpa [#allocation6], 0
    // Predicated region
    $region2: #{tpu_custom_call.1} parent=1 // pred_check
      _
    $region3: #{tpu_custom_call.1} parent=1 // pred_check_branch
      %17 = sbr.rel (0) target = $region5
    $region4: #{tpu_custom_call.1} parent=1 // pred_region
      %s19 = ssub.s32 512, 512
      %20 = vsyncadd [#allocation5], %s19
      %s21 = sshll.u32 [#allocation4], 4
      %s22 = int_to_ptr.vmem [resolvable:$true] %s21
      %27 = dma.hbm_to_vmem [thread:$0]  %s1, 512, %s22, [#allocation5], 128, 128, 8
    $region5: #{tpu_custom_call.1} parent=1 // pred_fallthru
      _
    // Predicated region
    $region6: #{tpu_custom_call.1} parent=1 // pred_check
      _
    $region7: #{tpu_custom_call.1} parent=1 // pred_check_branch
      %29 = sbr.rel (0) target = $region9
    $region8: #{tpu_custom_call.1} parent=1 // pred_region
      %s31 = ssub.s32 1536, 1536
      %32 = vsyncadd [#allocation8], %s31
      %s33 = sshll.u32 [#allocation7], 4
      %s34 = int_to_ptr.vmem [resolvable:$true] %s33
      %39 = dma.hbm_to_vmem [thread:$0]  %s2, 1536, %s34, [#allocation8], 384, 384, 24
    $region9: #{tpu_custom_call.1} parent=1 // pred_fallthru
      _
    // Predicated region
    $region10: #{tpu_custom_call.1} parent=1 // pred_check
      _
    $region11: #{tpu_custom_call.1} parent=1 // pred_check_branch
      %41 = sbr.rel (0) target = $region13
    $region12: #{tpu_custom_call.1} parent=1 // pred_region
      _
    $region13: #{tpu_custom_call.1} parent=1 // pred_fallthru
      _
    // Predicated region
    $region14: #{tpu_custom_call.1} parent=1 // pred_check
      _
    $region15: #{tpu_custom_call.1} parent=1 // pred_check_branch
      %43 = sbr.rel (0) target = $region17
    $region16: #{tpu_custom_call.1} parent=1 // pred_region
      %44 = dma.done [#allocation5], 512
    $region17: #{tpu_custom_call.1} parent=1 // pred_fallthru
      _
    // Predicated region
    $region18: #{tpu_custom_call.1} parent=1 // pred_check
      _
    $region19: #{tpu_custom_call.1} parent=1 // pred_check_branch
      %46 = sbr.rel (0) target = $region21
    $region20: #{tpu_custom_call.1} parent=1 // pred_region
      %47 = dma.done [#allocation8], 1536
    $region21: #{tpu_custom_call.1} parent=1 // pred_fallthru
      _
    %v48 = vld [vmem:[#allocation4] sm:$0xff]
    %v49 = vld [vmem:[#allocation4 + $0x8] sm:$0xff]
    %v50 = vld [vmem:[#allocation4 + $0x10] sm:$0xff]
    %v51 = vld [vmem:[#allocation4 + $0x18] sm:$0xff]
    %v52 = vld [vmem:[#allocation7] sm:$0xff]
    %v53 = vld [vmem:[#allocation7 + $0x8] sm:$0xff]
    %v54 = vld [vmem:[#allocation7 + $0x10] sm:$0xff]
    %v55 = vld [vmem:[#allocation7 + $0x18] sm:$0xff]
    %v56 = vld [vmem:[#allocation7 + $0x20] sm:$0xff]
    %v57 = vld [vmem:[#allocation7 + $0x28] sm:$0xff]
    %v58 = vld [vmem:[#allocation7 + $0x30] sm:$0xff]
    %v59 = vld [vmem:[#allocation7 + $0x38] sm:$0xff]
    %v60 = vld [vmem:[#allocation7 + $0x40] sm:$0xff]
    %v61 = vld [vmem:[#allocation7 + $0x48] sm:$0xff]
    %v62 = vld [vmem:[#allocation7 + $0x50] sm:$0xff]
    %v63 = vld [vmem:[#allocation7 + $0x58] sm:$0xff]
    %v64 = vld [vmem:[%s3] sm:$0x7]
    %v66 = vlaneseq
    %v67 = vshrl.u32 %v66, 7
    %v68 = vsub.s32 0, %v67
    %v69 = vrot.slane %v64, %v68
    %v70 = vlaneseq
    %v71 = vshrl.u32 %v70, 7
    %v72 = vsub.s32 1, %v71
    %v73 = vrot.slane %v64, %v72
    %v74 = vlaneseq
    %v75 = vshrl.u32 %v74, 7
    %v76 = vsub.s32 2, %v75
    %v77 = vrot.slane %v64, %v76
    %vm81 = vcmask 261120
    %v83 = vsel %vm81, %v48, 0
    %v86 = vsel %vm81, %v49, 0
    %v89 = vsel %vm81, %v50, 0
    %v92 = vsel %vm81, %v51, 0
    %94 = vmatprep.subr.mxu0 0.0
    %95 = vmatpush1.msra.mxu0 0.0
    %96 = vmatprep.subr.mxu0 0.0
    %97 = vmatpush1.msra.mxu0 0.0
    %98 = vmatprep.subr.mxu0 0.0
    %99 = vmatpush1.msra.mxu0 0.0
    %100 = vmatprep.subr.mxu0 0.0
    %101 = vmatpush1.msra.mxu0 0.0
    %102 = vmatprep.subr.mxu0 0.0
    %103 = vmatpush1.msra.mxu0 0.0
    %104 = vmatprep.subr.mxu0 0.0
    %105 = vmatpush1.msra.mxu0 0.0
    %106 = vmatprep.subr.mxu0 0.0
    %107 = vmatpush1.msra.mxu0 0.0
    %108 = vmatprep.subr.mxu0 0.0
    %109 = vmatpush1.msra.mxu0 0.0
    %110 = vmatprep.subr.mxu0 0.0
    %111 = vmatpush1.msra.mxu0 0.0
    %112 = vmatprep.subr.mxu0 0.0
    %113 = vmatpush1.msra.mxu0 0.0
    %114 = vmatprep.subr.mxu0 0.0
    %115 = vmatpush1.msra.mxu0 0.0
    %116 = vmatprep.subr.mxu0 0.0
    %117 = vmatpush1.msra.mxu0 0.0
    %118 = vmatprep.subr.mxu0 %v62
    %119 = vmatpush1.msra.mxu0 %v61
    %120 = vmatprep.subr.mxu0 %v59
    %121 = vmatpush1.msra.mxu0 %v58
    %122 = vmatprep.subr.mxu0 %v56
    %123 = vmatpush1.msra.mxu0 %v55
    %124 = vmatprep.subr.mxu0 %v53
    %125 = vmatpush1.msra.mxu0 %v52
    %126 = vmatprep.subr.mxu0 0.0
    %127 = vmatpush2.msra.mxu0 0.0
    %128 = vmatprep.subr.mxu0 0.0
    %129 = vmatpush2.msra.mxu0 0.0
    %130 = vmatprep.subr.mxu0 0.0
    %131 = vmatpush2.msra.mxu0 0.0
    %132 = vmatprep.subr.mxu0 0.0
    %133 = vmatpush2.msra.mxu0 0.0
    %134 = vmatprep.subr.mxu0 0.0
    %135 = vmatpush2.msra.mxu0 0.0
    %136 = vmatprep.subr.mxu0 0.0
    %137 = vmatpush2.msra.mxu0 0.0
    %138 = vmatprep.subr.mxu0 0.0
    %139 = vmatpush2.msra.mxu0 0.0
    %140 = vmatprep.subr.mxu0 0.0
    %141 = vmatpush2.msra.mxu0 0.0
    %142 = vmatprep.subr.mxu0 0.0
    %143 = vmatpush2.msra.mxu0 0.0
    %144 = vmatprep.subr.mxu0 0.0
    %145 = vmatpush2.msra.mxu0 0.0
    %146 = vmatprep.subr.mxu0 0.0
    %147 = vmatpush2.msra.mxu0 0.0
    %148 = vmatprep.subr.mxu0 0.0
    %149 = vmatpush2.msra.mxu0 0.0
    %150 = vmatprep.subr.mxu0 0.0
    %151 = vmatpush2.msra.mxu0 0.0
    %152 = vmatprep.subr.mxu0 0.0
    %153 = vmatpush2.msra.mxu0 0.0
    %154 = vmatprep.subr.mxu0 0.0
    %155 = vmatpush2.msra.mxu0 0.0
    %156 = vmatprep.subr.mxu0 0.0
    %157 = vmatpush2.msra.mxu0 0.0
    %158 = vmatprep.mubr.f32.mxu0 0.0
    %159 = vmatmul.mubr.f32.gmra.mxu0 %v83
    %v160 = vpop.f32.mrf.mxu0
    %v161 = vadd.f32 %v69, %v160
    %v162 = vpop.f32.mrf.mxu0
    %v163 = vadd.f32 %v73, %v162
    %164 = vmatprep.mubr.f32.mxu0 0.0
    %165 = vmatmul.mubr.f32.gmra.mxu0 %v86
    %v166 = vpop.f32.mrf.mxu0
    %v167 = vadd.f32 %v69, %v166
    %v168 = vpop.f32.mrf.mxu0
    %v169 = vadd.f32 %v73, %v168
    %170 = vmatprep.mubr.f32.mxu0 0.0
    %171 = vmatmul.mubr.f32.gmra.mxu0 %v89
    %v172 = vpop.f32.mrf.mxu0
    %v173 = vadd.f32 %v69, %v172
    %v174 = vpop.f32.mrf.mxu0
    %v175 = vadd.f32 %v73, %v174
    %176 = vmatprep.mubr.f32.mxu0 0.0
    %177 = vmatmul.mubr.f32.gmra.mxu0 %v92
    %v178 = vpop.f32.mrf.mxu0
    %v179 = vadd.f32 %v69, %v178
    %v180 = vpop.f32.mrf.mxu0
    %v181 = vadd.f32 %v73, %v180
    %182 = vdwg.mxu0
    %183 = vmatprep.subr.mxu0 0.0
    %184 = vmatpush1.msra.mxu0 0.0
    %185 = vmatprep.subr.mxu0 0.0
    %186 = vmatpush1.msra.mxu0 0.0
    %187 = vmatprep.subr.mxu0 0.0
    %188 = vmatpush1.msra.mxu0 0.0
    %189 = vmatprep.subr.mxu0 0.0
    %190 = vmatpush1.msra.mxu0 0.0
    %191 = vmatprep.subr.mxu0 0.0
    %192 = vmatpush1.msra.mxu0 0.0
    %193 = vmatprep.subr.mxu0 0.0
    %194 = vmatpush1.msra.mxu0 0.0
    %195 = vmatprep.subr.mxu0 0.0
    %196 = vmatpush1.msra.mxu0 0.0
    %197 = vmatprep.subr.mxu0 0.0
    %198 = vmatpush1.msra.mxu0 0.0
    %199 = vmatprep.subr.mxu0 0.0
    %200 = vmatpush1.msra.mxu0 0.0
    %201 = vmatprep.subr.mxu0 0.0
    %202 = vmatpush1.msra.mxu0 0.0
    %203 = vmatprep.subr.mxu0 0.0
    %204 = vmatpush1.msra.mxu0 0.0
    %205 = vmatprep.subr.mxu0 0.0
    %206 = vmatpush1.msra.mxu0 0.0
    %207 = vmatprep.subr.mxu0 0.0
    %208 = vmatpush1.msra.mxu0 %v63
    %209 = vmatprep.subr.mxu0 0.0
    %210 = vmatpush1.msra.mxu0 %v60
    %211 = vmatprep.subr.mxu0 0.0
    %212 = vmatpush1.msra.mxu0 %v57
    %213 = vmatprep.subr.mxu0 0.0
    %214 = vmatpush1.msra.mxu0 %v54
    %215 = vmatprep.subr.mxu0 0.0
    %216 = vmatpush2.msra.mxu0 0.0
    %217 = vmatprep.subr.mxu0 0.0
    %218 = vmatpush2.msra.mxu0 0.0
    %219 = vmatprep.subr.mxu0 0.0
    %220 = vmatpush2.msra.mxu0 0.0
    %221 = vmatprep.subr.mxu0 0.0
    %222 = vmatpush2.msra.mxu0 0.0
    %223 = vmatprep.subr.mxu0 0.0
    %224 = vmatpush2.msra.mxu0 0.0
    %225 = vmatprep.subr.mxu0 0.0
    %226 = vmatpush2.msra.mxu0 0.0
    %227 = vmatprep.subr.mxu0 0.0
    %228 = vmatpush2.msra.mxu0 0.0
    %229 = vmatprep.subr.mxu0 0.0
    %230 = vmatpush2.msra.mxu0 0.0
    %231 = vmatprep.subr.mxu0 0.0
    %232 = vmatpush2.msra.mxu0 0.0
    %233 = vmatprep.subr.mxu0 0.0
    %234 = vmatpush2.msra.mxu0 0.0
    %235 = vmatprep.subr.mxu0 0.0
    %236 = vmatpush2.msra.mxu0 0.0
    %237 = vmatprep.subr.mxu0 0.0
    %238 = vmatpush2.msra.mxu0 0.0
    %239 = vmatprep.subr.mxu0 0.0
    %240 = vmatpush2.msra.mxu0 0.0
    %241 = vmatprep.subr.mxu0 0.0
    %242 = vmatpush2.msra.mxu0 0.0
    %243 = vmatprep.subr.mxu0 0.0
    %244 = vmatpush2.msra.mxu0 0.0
    %245 = vmatprep.subr.mxu0 0.0
    %246 = vmatpush2.msra.mxu0 0.0
    %247 = vmatprep.mubr.f32.mxu0 0.0
    %248 = vmatmul.mubr.f32.gmra.mxu0 %v83
    %v249 = vpop.f32.mrf.mxu0
    %v250 = vadd.f32 %v77, %v249
    %v251 = vpop.f32.mrf.mxu0
    %252 = vmatprep.mubr.f32.mxu0 0.0
    %253 = vmatmul.mubr.f32.gmra.mxu0 %v86
    %v254 = vpop.f32.mrf.mxu0
    %v255 = vadd.f32 %v77, %v254
    %v256 = vpop.f32.mrf.mxu0
    %257 = vmatprep.mubr.f32.mxu0 0.0
    %258 = vmatmul.mubr.f32.gmra.mxu0 %v89
    %v259 = vpop.f32.mrf.mxu0
    %v260 = vadd.f32 %v77, %v259
    %v261 = vpop.f32.mrf.mxu0
    %262 = vmatprep.mubr.f32.mxu0 0.0
    %263 = vmatmul.mubr.f32.gmra.mxu0 %v92
    %v264 = vpop.f32.mrf.mxu0
    %v265 = vadd.f32 %v77, %v264
    %v266 = vpop.f32.mrf.mxu0
    %267 = vdwg.mxu0
    %v268 = vlaneseq
    %v269 = vand.u32 %v268, 127
    %270 = vmatprep.subr.mxu0 0.0
    %271 = vmatpush1.xpose.msra.mxu0 0.0
    %272 = vmatprep.subr.mxu0 0.0
    %273 = vmatpush1.xpose.msra.mxu0 0.0
    %274 = vmatprep.subr.mxu0 0.0
    %275 = vmatpush1.xpose.msra.mxu0 0.0
    %276 = vmatprep.subr.mxu0 0.0
    %277 = vmatpush1.xpose.msra.mxu0 0.0
    %278 = vmatprep.subr.mxu0 0.0
    %279 = vmatpush1.xpose.msra.mxu0 0.0
    %280 = vmatprep.subr.mxu0 0.0
    %281 = vmatpush1.xpose.msra.mxu0 0.0
    %282 = vmatprep.subr.mxu0 0.0
    %283 = vmatpush1.xpose.msra.mxu0 0.0
    %284 = vmatprep.subr.mxu0 0.0
    %285 = vmatpush1.xpose.msra.mxu0 0.0
    %286 = vmatprep.subr.mxu0 0.0
    %287 = vmatpush1.xpose.msra.mxu0 0.0
    %288 = vmatprep.subr.mxu0 0.0
    %289 = vmatpush1.xpose.msra.mxu0 0.0
    %290 = vmatprep.subr.mxu0 0.0
    %291 = vmatpush1.xpose.msra.mxu0 0.0
    %292 = vmatprep.subr.mxu0 0.0
    %293 = vmatpush1.xpose.msra.mxu0 0.0
    %294 = vmatprep.subr.mxu0 0.0
    %295 = vmatpush1.xpose.msra.mxu0 0.0
    %296 = vmatprep.subr.mxu0 0.0
    %297 = vmatpush1.xpose.msra.mxu0 0.0
    %298 = vmatprep.subr.mxu0 0.0
    %299 = vmatpush1.xpose.msra.mxu0 %v169
    %300 = vmatprep.subr.mxu0 0.0
    %301 = vmatpush1.xpose.msra.mxu0 %v163
    %302 = vmatprep.subr.mxu0 0.0
    %303 = vmatpush2.xpose.msra.mxu0 0.0
    %304 = vmatprep.subr.mxu0 0.0
    %305 = vmatpush2.xpose.msra.mxu0 0.0
    %306 = vmatprep.subr.mxu0 0.0
    %307 = vmatpush2.xpose.msra.mxu0 0.0
    %308 = vmatprep.subr.mxu0 0.0
    %309 = vmatpush2.xpose.msra.mxu0 0.0
    %310 = vmatprep.subr.mxu0 0.0
    %311 = vmatpush2.xpose.msra.mxu0 0.0
    %312 = vmatprep.subr.mxu0 0.0
    %313 = vmatpush2.xpose.msra.mxu0 0.0
    %314 = vmatprep.subr.mxu0 0.0
    %315 = vmatpush2.xpose.msra.mxu0 0.0
    %316 = vmatprep.subr.mxu0 0.0
    %317 = vmatpush2.xpose.msra.mxu0 0.0
    %318 = vmatprep.subr.mxu0 0.0
    %319 = vmatpush2.xpose.msra.mxu0 0.0
    %320 = vmatprep.subr.mxu0 0.0
    %321 = vmatpush2.xpose.msra.mxu0 0.0
    %322 = vmatprep.subr.mxu0 0.0
    %323 = vmatpush2.xpose.msra.mxu0 0.0
    %324 = vmatprep.subr.mxu0 0.0
    %325 = vmatpush2.xpose.msra.mxu0 0.0
    %326 = vmatprep.subr.mxu0 0.0
    %327 = vmatpush2.xpose.msra.mxu0 0.0
    %328 = vmatprep.subr.mxu0 0.0
    %329 = vmatpush2.xpose.msra.mxu0 0.0
    %330 = vmatprep.subr.mxu0 0.0
    %331 = vmatpush2.xpose.msra.mxu0 0.0
    %332 = vmatprep.subr.mxu0 0.0
    %333 = vmatpush2.xpose.msra.mxu0 0.0
    %334 = vmatprep.mubr.f32.mxu0 0.0
    %335 = vmatmul.mubr.f32.gmra.mxu0 %v161
    %v336 = vpop.f32.mrf.mxu0
    %v337 = vadd.f32 0.0, %v336
    %v338 = vpop.f32.mrf.mxu0
    %339 = vmatprep.mubr.f32.mxu0 0.0
    %340 = vmatmul.mubr.f32.gmra.mxu0 %v167
    %v341 = vpop.f32.mrf.mxu0
    %v342 = vadd.f32 0.0, %v341
    %v343 = vpop.f32.mrf.mxu0
    %344 = vdwg.mxu0
    %s345 = sld [smem:[#allocation3]]
    %v346 = vstv %s345
    %vm347 = vcmp.lt.s32.totalorder %v269, %v346
    %v348 = vsel %vm347, %v337, -1e+30
    %v349 = vsel %vm347, %v342, -1e+30
    %vm350 = vcmask 130048
    %v351 = vsel %vm350, %v348, -inf
    %352 = vmax.xlane.f32.xlu0 %v351
    %v353 = vpop.xlane.xlu0 %352
    %v354 = vsel %vm350, %v349, -inf
    %355 = vmax.xlane.f32.xlu0 %v354
    %v356 = vpop.xlane.xlu0 %355
    %v357 = vsub.f32 %v348, %v353
    %v358 = vsub.f32 %v349, %v356
    %v359 = vmul.f32 %v357, 1.442695
    %v360 = vpow.pop %v359
    %v361 = vmul.f32 %v358, 1.442695
    %v362 = vpow.pop %v361
    %v363 = vsel %vm350, %v360, 0.0
    %364 = vadd.xlane.f32.xlu0 %v363
    %v365 = vpop.xlane.xlu0 %364
    %v366 = vsel %vm350, %v362, 0.0
    %367 = vadd.xlane.f32.xlu0 %v366
    %v368 = vpop.xlane.xlu0 %367
    %v369 = vrcp.pop %v365
    %v370 = vrcp.pop %v368
    %v371 = vmul.f32 %v360, %v369
    %v372 = vmul.f32 %v362, %v370
    %v374 = vsel %vm350, %v371, 0
    %v377 = vsel %vm350, %v372, 0
    %379 = vmatprep.subr.mxu0 0.0
    %380 = vmatpush1.msra.mxu0 0.0
    %381 = vmatprep.subr.mxu0 0.0
    %382 = vmatpush1.msra.mxu0 0.0
    %383 = vmatprep.subr.mxu0 0.0
    %384 = vmatpush1.msra.mxu0 0.0
    %385 = vmatprep.subr.mxu0 0.0
    %386 = vmatpush1.msra.mxu0 0.0
    %387 = vmatprep.subr.mxu0 0.0
    %388 = vmatpush1.msra.mxu0 0.0
    %389 = vmatprep.subr.mxu0 0.0
    %390 = vmatpush1.msra.mxu0 0.0
    %391 = vmatprep.subr.mxu0 0.0
    %392 = vmatpush1.msra.mxu0 0.0
    %393 = vmatprep.subr.mxu0 0.0
    %394 = vmatpush1.msra.mxu0 0.0
    %395 = vmatprep.subr.mxu0 0.0
    %396 = vmatpush1.msra.mxu0 0.0
    %397 = vmatprep.subr.mxu0 0.0
    %398 = vmatpush1.msra.mxu0 0.0
    %399 = vmatprep.subr.mxu0 0.0
    %400 = vmatpush1.msra.mxu0 0.0
    %401 = vmatprep.subr.mxu0 0.0
    %402 = vmatpush1.msra.mxu0 0.0
    %403 = vmatprep.subr.mxu0 0.0
    %404 = vmatpush1.msra.mxu0 0.0
    %405 = vmatprep.subr.mxu0 0.0
    %406 = vmatpush1.msra.mxu0 0.0
    %407 = vmatprep.subr.mxu0 0.0
    %408 = vmatpush1.msra.mxu0 %v255
    %409 = vmatprep.subr.mxu0 0.0
    %410 = vmatpush1.msra.mxu0 %v250
    %411 = vmatprep.subr.mxu0 0.0
    %412 = vmatpush2.msra.mxu0 0.0
    %413 = vmatprep.subr.mxu0 0.0
    %414 = vmatpush2.msra.mxu0 0.0
    %415 = vmatprep.subr.mxu0 0.0
    %416 = vmatpush2.msra.mxu0 0.0
    %417 = vmatprep.subr.mxu0 0.0
    %418 = vmatpush2.msra.mxu0 0.0
    %419 = vmatprep.subr.mxu0 0.0
    %420 = vmatpush2.msra.mxu0 0.0
    %421 = vmatprep.subr.mxu0 0.0
    %422 = vmatpush2.msra.mxu0 0.0
    %423 = vmatprep.subr.mxu0 0.0
    %424 = vmatpush2.msra.mxu0 0.0
    %425 = vmatprep.subr.mxu0 0.0
    %426 = vmatpush2.msra.mxu0 0.0
    %427 = vmatprep.subr.mxu0 0.0
    %428 = vmatpush2.msra.mxu0 0.0
    %429 = vmatprep.subr.mxu0 0.0
    %430 = vmatpush2.msra.mxu0 0.0
    %431 = vmatprep.subr.mxu0 0.0
    %432 = vmatpush2.msra.mxu0 0.0
    %433 = vmatprep.subr.mxu0 0.0
    %434 = vmatpush2.msra.mxu0 0.0
    %435 = vmatprep.subr.mxu0 0.0
    %436 = vmatpush2.msra.mxu0 0.0
    %437 = vmatprep.subr.mxu0 0.0
    %438 = vmatpush2.msra.mxu0 0.0
    %439 = vmatprep.subr.mxu0 0.0
    %440 = vmatpush2.msra.mxu0 0.0
    %441 = vmatprep.subr.mxu0 0.0
    %442 = vmatpush2.msra.mxu0 0.0
    %443 = vmatprep.mubr.f32.mxu0 0.0
    %444 = vmatmul.mubr.f32.gmra.mxu0 %v374
    %v445 = vpop.f32.mrf.mxu0
    %v446 = vadd.f32 %v250, %v445
    %v447 = vpop.f32.mrf.mxu0
    %448 = vmatprep.mubr.f32.mxu0 0.0
    %449 = vmatmul.mubr.f32.gmra.mxu0 %v377
    %v450 = vpop.f32.mrf.mxu0
    %v451 = vadd.f32 %v255, %v450
    %v452 = vpop.f32.mrf.mxu0
    %453 = vdwg.mxu0
    %454 = vst [vmem:[#allocation9] sm:$0xff] %v446
    %455 = vst [vmem:[#allocation9 + $0x8] sm:$0xff] %v451
    %456 = vmatprep.subr.mxu0 0.0
    %457 = vmatpush1.xpose.msra.mxu0 0.0
    %458 = vmatprep.subr.mxu0 0.0
    %459 = vmatpush1.xpose.msra.mxu0 0.0
    %460 = vmatprep.subr.mxu0 0.0
    %461 = vmatpush1.xpose.msra.mxu0 0.0
    %462 = vmatprep.subr.mxu0 0.0
    %463 = vmatpush1.xpose.msra.mxu0 0.0
    %464 = vmatprep.subr.mxu0 0.0
    %465 = vmatpush1.xpose.msra.mxu0 0.0
    %466 = vmatprep.subr.mxu0 0.0
    %467 = vmatpush1.xpose.msra.mxu0 0.0
    %468 = vmatprep.subr.mxu0 0.0
    %469 = vmatpush1.xpose.msra.mxu0 0.0
    %470 = vmatprep.subr.mxu0 0.0
    %471 = vmatpush1.xpose.msra.mxu0 0.0
    %472 = vmatprep.subr.mxu0 0.0
    %473 = vmatpush1.xpose.msra.mxu0 0.0
    %474 = vmatprep.subr.mxu0 0.0
    %475 = vmatpush1.xpose.msra.mxu0 0.0
    %476 = vmatprep.subr.mxu0 0.0
    %477 = vmatpush1.xpose.msra.mxu0 0.0
    %478 = vmatprep.subr.mxu0 0.0
    %479 = vmatpush1.xpose.msra.mxu0 0.0
    %480 = vmatprep.subr.mxu0 0.0
    %481 = vmatpush1.xpose.msra.mxu0 0.0
    %482 = vmatprep.subr.mxu0 0.0
    %483 = vmatpush1.xpose.msra.mxu0 0.0
    %484 = vmatprep.subr.mxu0 0.0
    %485 = vmatpush1.xpose.msra.mxu0 %v181
    %486 = vmatprep.subr.mxu0 0.0
    %487 = vmatpush1.xpose.msra.mxu0 %v175
    %488 = vmatprep.subr.mxu0 0.0
    %489 = vmatpush2.xpose.msra.mxu0 0.0
    %490 = vmatprep.subr.mxu0 0.0
    %491 = vmatpush2.xpose.msra.mxu0 0.0
    %492 = vmatprep.subr.mxu0 0.0
    %493 = vmatpush2.xpose.msra.mxu0 0.0
    %494 = vmatprep.subr.mxu0 0.0
    %495 = vmatpush2.xpose.msra.mxu0 0.0
    %496 = vmatprep.subr.mxu0 0.0
    %497 = vmatpush2.xpose.msra.mxu0 0.0
    %498 = vmatprep.subr.mxu0 0.0
    %499 = vmatpush2.xpose.msra.mxu0 0.0
    %500 = vmatprep.subr.mxu0 0.0
    %501 = vmatpush2.xpose.msra.mxu0 0.0
    %502 = vmatprep.subr.mxu0 0.0
    %503 = vmatpush2.xpose.msra.mxu0 0.0
    %504 = vmatprep.subr.mxu0 0.0
    %505 = vmatpush2.xpose.msra.mxu0 0.0
    %506 = vmatprep.subr.mxu0 0.0
    %507 = vmatpush2.xpose.msra.mxu0 0.0
    %508 = vmatprep.subr.mxu0 0.0
    %509 = vmatpush2.xpose.msra.mxu0 0.0
    %510 = vmatprep.subr.mxu0 0.0
    %511 = vmatpush2.xpose.msra.mxu0 0.0
    %512 = vmatprep.subr.mxu0 0.0
    %513 = vmatpush2.xpose.msra.mxu0 0.0
    %514 = vmatprep.subr.mxu0 0.0
    %515 = vmatpush2.xpose.msra.mxu0 0.0
    %516 = vmatprep.subr.mxu0 0.0
    %517 = vmatpush2.xpose.msra.mxu0 0.0
    %518 = vmatprep.subr.mxu0 0.0
    %519 = vmatpush2.xpose.msra.mxu0 0.0
    %520 = vmatprep.mubr.f32.mxu0 0.0
    %521 = vmatmul.mubr.f32.gmra.mxu0 %v173
    %v522 = vpop.f32.mrf.mxu0
    %v523 = vadd.f32 0.0, %v522
    %v524 = vpop.f32.mrf.mxu0
    %525 = vmatprep.mubr.f32.mxu0 0.0
    %526 = vmatmul.mubr.f32.gmra.mxu0 %v179
    %v527 = vpop.f32.mrf.mxu0
    %v528 = vadd.f32 0.0, %v527
    %v529 = vpop.f32.mrf.mxu0
    %530 = vdwg.mxu0
    %s531 = sld [smem:[#allocation3 + $0x1]]
    %v532 = vstv %s531
    %vm533 = vcmp.lt.s32.totalorder %v269, %v532
    %v534 = vsel %vm533, %v523, -1e+30
    %v535 = vsel %vm533, %v528, -1e+30
    %v536 = vsel %vm350, %v534, -inf
    %537 = vmax.xlane.f32.xlu0 %v536
    %v538 = vpop.xlane.xlu0 %537
    %v539 = vsel %vm350, %v535, -inf
    %540 = vmax.xlane.f32.xlu0 %v539
    %v541 = vpop.xlane.xlu0 %540
    %v542 = vsub.f32 %v534, %v538
    %v543 = vsub.f32 %v535, %v541
    %v544 = vmul.f32 %v542, 1.442695
    %v545 = vpow.pop %v544
    %v546 = vmul.f32 %v543, 1.442695
    %v547 = vpow.pop %v546
    %v548 = vsel %vm350, %v545, 0.0
    %549 = vadd.xlane.f32.xlu0 %v548
    %v550 = vpop.xlane.xlu0 %549
    %v551 = vsel %vm350, %v547, 0.0
    %552 = vadd.xlane.f32.xlu0 %v551
    %v553 = vpop.xlane.xlu0 %552
    %v554 = vrcp.pop %v550
    %v555 = vrcp.pop %v553
    %v556 = vmul.f32 %v545, %v554
    %v557 = vmul.f32 %v547, %v555
    %v559 = vsel %vm350, %v556, 0
    %v562 = vsel %vm350, %v557, 0
    %564 = vmatprep.subr.mxu0 0.0
    %565 = vmatpush1.msra.mxu0 0.0
    %566 = vmatprep.subr.mxu0 0.0
    %567 = vmatpush1.msra.mxu0 0.0
    %568 = vmatprep.subr.mxu0 0.0
    %569 = vmatpush1.msra.mxu0 0.0
    %570 = vmatprep.subr.mxu0 0.0
    %571 = vmatpush1.msra.mxu0 0.0
    %572 = vmatprep.subr.mxu0 0.0
    %573 = vmatpush1.msra.mxu0 0.0
    %574 = vmatprep.subr.mxu0 0.0
    %575 = vmatpush1.msra.mxu0 0.0
    %576 = vmatprep.subr.mxu0 0.0
    %577 = vmatpush1.msra.mxu0 0.0
    %578 = vmatprep.subr.mxu0 0.0
    %579 = vmatpush1.msra.mxu0 0.0
    %580 = vmatprep.subr.mxu0 0.0
    %581 = vmatpush1.msra.mxu0 0.0
    %582 = vmatprep.subr.mxu0 0.0
    %583 = vmatpush1.msra.mxu0 0.0
    %584 = vmatprep.subr.mxu0 0.0
    %585 = vmatpush1.msra.mxu0 0.0
    %586 = vmatprep.subr.mxu0 0.0
    %587 = vmatpush1.msra.mxu0 0.0
    %588 = vmatprep.subr.mxu0 0.0
    %589 = vmatpush1.msra.mxu0 0.0
    %590 = vmatprep.subr.mxu0 0.0
    %591 = vmatpush1.msra.mxu0 0.0
    %592 = vmatprep.subr.mxu0 0.0
    %593 = vmatpush1.msra.mxu0 %v265
    %594 = vmatprep.subr.mxu0 0.0
    %595 = vmatpush1.msra.mxu0 %v260
    %596 = vmatprep.subr.mxu0 0.0
    %597 = vmatpush2.msra.mxu0 0.0
    %598 = vmatprep.subr.mxu0 0.0
    %599 = vmatpush2.msra.mxu0 0.0
    %600 = vmatprep.subr.mxu0 0.0
    %601 = vmatpush2.msra.mxu0 0.0
    %602 = vmatprep.subr.mxu0 0.0
    %603 = vmatpush2.msra.mxu0 0.0
    %604 = vmatprep.subr.mxu0 0.0
    %605 = vmatpush2.msra.mxu0 0.0
    %606 = vmatprep.subr.mxu0 0.0
    %607 = vmatpush2.msra.mxu0 0.0
    %608 = vmatprep.subr.mxu0 0.0
    %609 = vmatpush2.msra.mxu0 0.0
    %610 = vmatprep.subr.mxu0 0.0
    %611 = vmatpush2.msra.mxu0 0.0
    %612 = vmatprep.subr.mxu0 0.0
    %613 = vmatpush2.msra.mxu0 0.0
    %614 = vmatprep.subr.mxu0 0.0
    %615 = vmatpush2.msra.mxu0 0.0
    %616 = vmatprep.subr.mxu0 0.0
    %617 = vmatpush2.msra.mxu0 0.0
    %618 = vmatprep.subr.mxu0 0.0
    %619 = vmatpush2.msra.mxu0 0.0
    %620 = vmatprep.subr.mxu0 0.0
    %621 = vmatpush2.msra.mxu0 0.0
    %622 = vmatprep.subr.mxu0 0.0
    %623 = vmatpush2.msra.mxu0 0.0
    %624 = vmatprep.subr.mxu0 0.0
    %625 = vmatpush2.msra.mxu0 0.0
    %626 = vmatprep.subr.mxu0 0.0
    %627 = vmatpush2.msra.mxu0 0.0
    %628 = vmatprep.mubr.f32.mxu0 0.0
    %629 = vmatmul.mubr.f32.gmra.mxu0 %v559
    %v630 = vpop.f32.mrf.mxu0
    %v631 = vadd.f32 %v260, %v630
    %v632 = vpop.f32.mrf.mxu0
    %633 = vmatprep.mubr.f32.mxu0 0.0
    %634 = vmatmul.mubr.f32.gmra.mxu0 %v562
    %v635 = vpop.f32.mrf.mxu0
    %v636 = vadd.f32 %v265, %v635
    %v637 = vpop.f32.mrf.mxu0
    %638 = vdwg.mxu0
    %639 = vst [vmem:[#allocation9 + $0x10] sm:$0xff] %v631
    %640 = vst [vmem:[#allocation9 + $0x18] sm:$0xff] %v636
    // Predicated region
    $region22: #{tpu_custom_call.1} parent=1 // pred_check
      _
    $region23: #{tpu_custom_call.1} parent=1 // pred_check_branch
      %642 = sbr.rel (0) target = $region25
    $region24: #{tpu_custom_call.1} parent=1 // pred_region
      %s644 = ssub.s32 512, 512
      %645 = vsyncadd [#allocation6], %s644
      %s646 = sshll.u32 [#allocation9], 4
      %s647 = int_to_ptr.vmem [resolvable:$true] %s646
      %652 = dma.vmem_to_hbm [thread:$0]  %s647, 512, %s4, [#allocation6], 128, 128, 8
    $region25: #{tpu_custom_call.1} parent=1 // pred_fallthru
      _
    // Predicated region
    $region26: #{tpu_custom_call.1} parent=1 // pred_check
      _
    $region27: #{tpu_custom_call.1} parent=1 // pred_check_branch
      %654 = sbr.rel (0) target = $region29
    $region28: #{tpu_custom_call.1} parent=1 // pred_region
      %655 = dma.done [#allocation6], 512
    $region29: #{tpu_custom_call.1} parent=1 // pred_fallthru
      _
    %656 = vsyncpa [#allocation5], 1
    %657 = vsyncpa [#allocation8], 1
    %658 = vsyncpa [#allocation6], 1

</llo_original>
